<compile_context>
chip_gen: v5e
topology: v5e:2x2
jax: 0.10.0
libtpu: 0.0.40
codegen_flags: <defaults>
</compile_context>

<pallas_src>
import functools

import jax
import jax.numpy as jnp
from jax.experimental import pallas as pl
from jax.experimental.pallas import tpu as pltpu


def _soft_ce_kernel(logits_ref, target_ref, out_ref, acc_ref, *,
                    n_rows, block_n, steps):
    # grid = (num_splits, steps): axis 0 is the (mega)core split, axis 1 is
    # the sequential reduction over row tiles.
    s = pl.program_id(0)
    i = pl.program_id(1)

    @pl.when(i == 0)
    def _():
        acc_ref[...] = jnp.zeros_like(acc_ref)

    x = logits_ref[...].astype(jnp.float32)   # (block_n, C)
    t = target_ref[...].astype(jnp.float32)   # (block_n, C)

    # row_loss = sum_c t_c * (lse(x) - x_c) = sum_c -t_c * log_softmax(x)_c
    # (all summands non-negative -> no cancellation).
    m = jnp.max(x, axis=-1, keepdims=True)                               # (bn, 1)
    lse = jnp.log(jnp.sum(jnp.exp(x - m), axis=-1, keepdims=True)) + m   # (bn, 1)
    row_loss = jnp.sum(t * (lse - x), axis=-1, keepdims=True)            # (bn, 1)

    # Mask logical rows beyond the real batch (partial last tile, or fully
    # out-of-bounds tiles on the split axis). OOB reads may be garbage/NaN;
    # jnp.where selects, so that is harmless.
    row0 = (s * steps + i) * block_n
    ridx = jax.lax.broadcasted_iota(jnp.int32, (block_n, 1), 0) + row0
    row_loss = jnp.where(ridx < n_rows, row_loss, 0.0)

    # Tiny per-step cross-sublane reduce (XLU slot is idle; kernel is
    # HBM-bound); broadcast-accumulate into a fixed (8, 128) scratch.
    acc_ref[...] += jnp.sum(row_loss)

    @pl.when(i == pl.num_programs(1) - 1)
    def _():
        # Every element of acc holds this split's partial sum; emit it once
        # at lane/sublane (0, 0) of this split's output block, zeros elsewhere.
        r = jax.lax.broadcasted_iota(jnp.int32, out_ref.shape, 0)
        c = jax.lax.broadcasted_iota(jnp.int32, out_ref.shape, 1)
        out_ref[...] = jnp.where((r == 0) & (c == 0), acc_ref[...], 0.0)


def _round_up(x, m):
    return ((x + m - 1) // m) * m


def _device_profile():
    """Per-generation knobs: TensorCores per device, VMEM cap, tile budget."""
    kind = ""
    try:
        kind = jax.devices()[0].device_kind.lower()
    except Exception:  # pragma: no cover - be conservative if query fails
        pass
    if "7" in kind:
        # v7x: 64 MiB VMEM per TC, 2 TensorCores per chip.
        return {"num_cores": 2, "vmem_cap": 48 << 20, "tile_budget": 16 << 20}
    # v5e / v6e (and default): 128 MiB VMEM, single TensorCore.
    return {"num_cores": 1, "vmem_cap": 96 << 20, "tile_budget": 40 << 20}


def soft_cross_entropy(logits, target):
    """logits, target: (N, C) float arrays. Returns scalar float32 loss."""
    N, C = logits.shape
    assert target.shape == (N, C)

    prof = _device_profile()
    isz_l = jnp.dtype(logits.dtype).itemsize
    isz_t = jnp.dtype(target.dtype).itemsize

    # Lane-padded footprint of one row in VMEM (no data padding is done).
    c_pad = _round_up(max(C, 128), 128)
    # Sublane packing granule: 8 rows for 32-bit, 16 for bf16, 32 for 8-bit.
    sub = max(8, 32 // isz_l, 32 // isz_t)

    # Per-row VMEM bytes: 2 inputs x 2 pipeline buffers, plus ~4 live f32
    # intermediates created by the in-kernel astype/exp chain.
    bytes_per_row = 2 * c_pad * (isz_l + isz_t) + 4 * c_pad * 4
    block_n = max(sub, (prof["tile_budget"] // bytes_per_row) // sub * sub)
    block_n = min(block_n, _round_up(N, sub))

    num_tiles = pl.cdiv(N, block_n)
    # 2-way split only on multi-TensorCore chips (v7x); on v5e/v6e it only
    # wastes a grid step + padded-tile reads.
    num_splits = prof["num_cores"] if (prof["num_cores"] > 1 and num_tiles >= 2) else 1
    steps = pl.cdiv(num_tiles, num_splits)

    vmem_needed = (2 * block_n * c_pad * (isz_l + isz_t)   # double-buffered inputs
                   + 4 * block_n * c_pad * 4               # f32 intermediates
                   + 4 * 8 * 128 * 4)                      # acc + out block (margin)
    vmem_limit = int(min(max(int(vmem_needed * 1.2), 32 << 20), prof["vmem_cap"]))

    kernel = functools.partial(_soft_ce_kernel,
                               n_rows=N, block_n=block_n, steps=steps)

    out = pl.pallas_call(
        kernel,
        out_shape=jax.ShapeDtypeStruct((num_splits * 8, 128), jnp.float32),
        grid_spec=pltpu.PrefetchScalarGridSpec(
            num_scalar_prefetch=0,
            grid=(num_splits, steps),
            in_specs=[
                # Class axis = full array extent (no 128-multiple requirement).
                pl.BlockSpec((block_n, C), lambda s, i: (s * steps + i, 0)),
                pl.BlockSpec((block_n, C), lambda s, i: (s * steps + i, 0)),
            ],
            out_specs=pl.BlockSpec((8, 128), lambda s, i: (s, 0)),
            scratch_shapes=[pltpu.VMEM((8, 128), jnp.float32)],
        ),
        compiler_params=pltpu.CompilerParams(
            dimension_semantics=("parallel", "arbitrary"),
            vmem_limit_bytes=vmem_limit,
        ),
    )(logits, target)

    # Each split wrote its partial at [split*8, 0]; everything else is 0.
    return jnp.sum(out) / jnp.float32(N)


def _reference(logits, target):
    logp = jax.nn.log_softmax(logits.astype(jnp.float32), axis=1)
    return jnp.mean(jnp.sum(-target.astype(jnp.float32) * logp, axis=1))


if __name__ == "__main__":
    key = jax.random.PRNGKey(0)
    k1, k2 = jax.random.split(key)

    N, C = 16, 32
    logits = jax.random.normal(k1, (N, C), dtype=jnp.float32)
    # Soft targets: a probability distribution over classes per row.
    target = jax.nn.softmax(jax.random.normal(k2, (N, C), dtype=jnp.float32), axis=1)

    loss = soft_cross_entropy(logits, target)
    jax.block_until_ready(loss)

    ref = _reference(logits, target)
    assert jnp.allclose(loss, ref, rtol=1e-5, atol=1e-5), (loss, ref)

    print("KERNEL_OK")
</pallas_src>

<mosaic_0001>
module attributes {stable_mosaic.version = 11 : i64} {
  func.func @_soft_ce_kernel(%arg0: i32, %arg1: i32, %arg2: memref<16x32xf32, #tpu.memory_space<vmem>>, %arg3: memref<16x32xf32, #tpu.memory_space<vmem>>, %arg4: memref<8x128xf32, #tpu.memory_space<vmem>>, %arg5: memref<8x128xf32, #tpu.memory_space<vmem>>) attributes {dimension_semantics = [#tpu.dimension_semantics<parallel>, #tpu.dimension_semantics<arbitrary>], iteration_bounds = array<i64: 1, 1>, scalar_prefetch = 0 : i64, scratch_operands = 1 : i64, tpu.core_type = #tpu.core_type<tc>, window_params = [{transform_indices = @transform_0, window_bounds = array<i64: 16, 32>}, {transform_indices = @transform_1, window_bounds = array<i64: 16, 32>}, {transform_indices = @transform_2, window_bounds = array<i64: 8, 128>}]} {
    %c0_i32 = arith.constant 0 : i32
    %0 = arith.cmpi eq, %arg1, %c0_i32 : i32
    %1 = arith.extui %0 : i1 to i32
    %c0_i32_0 = arith.constant 0 : i32
    %2 = arith.cmpi ne, %1, %c0_i32_0 : i32
    scf.if %2 {
      %cst_15 = arith.constant 0.000000e+00 : f32
      %40 = vector.broadcast %cst_15 : f32 to vector<8x128xf32>
      %c0_16 = arith.constant 0 : index
      %c0_17 = arith.constant 0 : index
      %41 = vector.load %arg5[%c0_16, %c0_17] : memref<8x128xf32, #tpu.memory_space<vmem>>, vector<8x128xf32>
      tpu.vector_store %arg5[%c0_16, %c0_17], %40 {strides = array<i32>} : memref<8x128xf32, #tpu.memory_space<vmem>>, vector<8x128xf32>,
    } else {
    }
    %c0 = arith.constant 0 : index
    %c0_1 = arith.constant 0 : index
    %3 = vector.load %arg2[%c0, %c0_1] : memref<16x32xf32, #tpu.memory_space<vmem>>, vector<16x32xf32>
    %c0_2 = arith.constant 0 : index
    %c0_3 = arith.constant 0 : index
    %4 = vector.load %arg3[%c0_2, %c0_3] : memref<16x32xf32, #tpu.memory_space<vmem>>, vector<16x32xf32>
    %cst = arith.constant dense<0xFF800000> : vector<16xf32>
    %5 = vector.multi_reduction <maximumf>, %3, %cst [1] : vector<16x32xf32> to vector<16xf32>
    %6 = vector.shape_cast %5 : vector<16xf32> to vector<16x1xf32>
    %7 = vector.broadcast %6 : vector<16x1xf32> to vector<16x32xf32>
    %8 = arith.subf %3, %7 : vector<16x32xf32>
    %9 = math.exp %8 : vector<16x32xf32>
    %cst_4 = arith.constant dense<0.000000e+00> : vector<16xf32>
    %10 = vector.multi_reduction <add>, %9, %cst_4 [1] : vector<16x32xf32> to vector<16xf32>
    %11 = vector.shape_cast %10 : vector<16xf32> to vector<16x1xf32>
    %12 = math.log %11 : vector<16x1xf32>
    %13 = arith.addf %12, %6 : vector<16x1xf32>
    %14 = vector.broadcast %13 : vector<16x1xf32> to vector<16x32xf32>
    %15 = arith.subf %14, %3 : vector<16x32xf32>
    %16 = arith.mulf %4, %15 : vector<16x32xf32>
    %cst_5 = arith.constant dense<0.000000e+00> : vector<16xf32>
    %17 = vector.multi_reduction <add>, %16, %cst_5 [1] : vector<16x32xf32> to vector<16xf32>
    %18 = vector.shape_cast %17 : vector<16xf32> to vector<16x1xf32>
    %c1_i32 = arith.constant 1 : i32
    %19 = arith.muli %arg0, %c1_i32 : i32
    %20 = arith.addi %19, %arg1 : i32
    %c16_i32 = arith.constant 16 : i32
    %21 = arith.muli %20, %c16_i32 : i32
    %22 = tpu.iota {dimensions = array<i32: 0>} : vector<16x1xi32>
    %23 = vector.broadcast %21 : i32 to vector<16x1xi32>
    %24 = arith.addi %22, %23 : vector<16x1xi32>
    %c16_i32_6 = arith.constant 16 : i32
    %25 = vector.broadcast %c16_i32_6 : i32 to vector<16x1xi32>
    %26 = arith.cmpi slt, %24, %25 : vector<16x1xi32>
    %cst_7 = arith.constant 0.000000e+00 : f32
    %27 = vector.broadcast %cst_7 : f32 to vector<16x1xf32>
    %28 = arith.select %26, %18, %27 : vector<16x1xi1>, vector<16x1xf32>
    %c0_8 = arith.constant 0 : index
    %c0_9 = arith.constant 0 : index
    %29 = vector.load %arg5[%c0_8, %c0_9] : memref<8x128xf32, #tpu.memory_space<vmem>>, vector<8x128xf32>
    %30 = vector.shape_cast %28 : vector<16x1xf32> to vector<1x16x1xf32>
    %cst_10 = arith.constant dense<0.000000e+00> : vector<1xf32>
    %31 = vector.multi_reduction <add>, %30, %cst_10 [1, 2] : vector<1x16x1xf32> to vector<1xf32>
    %32 = vector.shape_cast %31 : vector<1xf32> to vector<1x1x1xf32>
    %33 = vector.extract %32[0, 0, 0] : f32 from vector<1x1x1xf32>
    %34 = vector.broadcast %33 : f32 to vector<8x128xf32>
    %35 = arith.addf %29, %34 : vector<8x128xf32>
    %c0_11 = arith.constant 0 : index
    %c0_12 = arith.constant 0 : index
    %36 = vector.load %arg5[%c0_11, %c0_12] : memref<8x128xf32, #tpu.memory_space<vmem>>, vector<8x128xf32>
    tpu.vector_store %arg5[%c0_11, %c0_12], %35 {strides = array<i32>} : memref<8x128xf32, #tpu.memory_space<vmem>>, vector<8x128xf32>,
    %c0_i32_13 = arith.constant 0 : i32
    %37 = arith.cmpi eq, %arg1, %c0_i32_13 : i32
    %38 = arith.extui %37 : i1 to i32
    %c0_i32_14 = arith.constant 0 : i32
    %39 = arith.cmpi ne, %38, %c0_i32_14 : i32
    scf.if %39 {
      %40 = tpu.iota {dimensions = array<i32: 0>} : vector<8x128xi32>
      %41 = tpu.iota {dimensions = array<i32: 1>} : vector<8x128xi32>
      %c0_i32_15 = arith.constant 0 : i32
      %42 = vector.broadcast %c0_i32_15 : i32 to vector<8x128xi32>
      %43 = arith.cmpi eq, %40, %42 : vector<8x128xi32>
      %c0_i32_16 = arith.constant 0 : i32
      %44 = vector.broadcast %c0_i32_16 : i32 to vector<8x128xi32>
      %45 = arith.cmpi eq, %41, %44 : vector<8x128xi32>
      %46 = arith.andi %43, %45 : vector<8x128xi1>
      %c0_17 = arith.constant 0 : index
      %c0_18 = arith.constant 0 : index
      %47 = vector.load %arg5[%c0_17, %c0_18] : memref<8x128xf32, #tpu.memory_space<vmem>>, vector<8x128xf32>
      %cst_19 = arith.constant 0.000000e+00 : f32
      %48 = vector.broadcast %cst_19 : f32 to vector<8x128xf32>
      %49 = arith.select %46, %47, %48 : vector<8x128xi1>, vector<8x128xf32>
      %c0_20 = arith.constant 0 : index
      %c0_21 = arith.constant 0 : index
      %50 = vector.load %arg4[%c0_20, %c0_21] : memref<8x128xf32, #tpu.memory_space<vmem>>, vector<8x128xf32>
      tpu.vector_store %arg4[%c0_20, %c0_21], %49 {strides = array<i32>} : memref<8x128xf32, #tpu.memory_space<vmem>>, vector<8x128xf32>,
    } else {
    }
    return
  }
  func.func @transform_0(%arg0: i32, %arg1: i32) -> (i32, i32) {
    %c1_i32 = arith.constant 1 : i32
    %0 = arith.muli %arg0, %c1_i32 : i32
    %1 = arith.addi %0, %arg1 : i32
    %c0_i32 = arith.constant 0 : i32
    %c0_i32_0 = arith.constant 0 : i32
    return %1, %c0_i32 : i32, i32
  }
  func.func @transform_1(%arg0: i32, %arg1: i32) -> (i32, i32) {
    %c1_i32 = arith.constant 1 : i32
    %0 = arith.muli %arg0, %c1_i32 : i32
    %1 = arith.addi %0, %arg1 : i32
    %c0_i32 = arith.constant 0 : i32
    %c0_i32_0 = arith.constant 0 : i32
    return %1, %c0_i32 : i32, i32
  }
  func.func @transform_2(%arg0: i32, %arg1: i32) -> (i32, i32) {
    %c0_i32 = arith.constant 0 : i32
    %c0_i32_0 = arith.constant 0 : i32
    return %arg0, %c0_i32 : i32, i32
  }
}

</mosaic_0001>

<llo_original>
// kernel: tpu_custom_call.1
$region0: #{tpu_custom_call.1}
  #allocation0 [shape = 'u32[]', space=smem, size = 0x4, offset = 0x4, fixed_abs, tag = 'smem constant byte address 0x4 - core index']
  #allocation1 [shape = 'u32[72,128]{1,0:T(1,128)}', space=vmem, size = 0x9000, scoped, tag = 'internal scratch']
  #allocation2 [shape = 'f32[8,128]{1,0:T(8,128)}', space=vmem, size = 0x1000, scoped, tag = 'scratch operand']
  %s0 = inlined_call_operand.hbm [shape: f32[16,32], index: 0, kind: input, shape index: {}]
  %s1 = inlined_call_operand.hbm [shape: f32[16,32], index: 1, kind: input, shape index: {}]
  %s2 = inlined_call_operand.hbm [shape: f32[8,128], index: 2, kind: output, shape index: {}]
  %s3 = sld [smem:[#allocation0]]
  $region34: #{tpu_custom_call.1} parent=0
    _
  %s5 = ssub.s32 1, %s3
  %s6 = scalar_select 0, %s5, %s3
  $region1: #{tpu_custom_call.1} parent=0
    #allocation3 [shape = 'u8[8192]{0}', space=vmem, size = 0x2000, scoped, tag = 'input window, operand 0, single buffered']
    #allocation4 [shape = 's32[1]{0}', space=sflag, size = 0x4, scoped, tag = 'scoped memory for tpu_custom_call.1']
    #allocation5 [shape = 's32[1]{0}', space=sflag, size = 0x4, scoped, tag = 'scoped memory for tpu_custom_call.1']
    #allocation6 [shape = 'u8[8192]{0}', space=vmem, size = 0x2000, scoped, tag = 'input window, operand 1, single buffered']
    #allocation7 [shape = 's32[1]{0}', space=sflag, size = 0x4, scoped, tag = 'scoped memory for tpu_custom_call.1']
    #allocation8 [shape = 'u8[4096]{0}', space=vmem, size = 0x1000, scoped, tag = 'output window, operand 0, single buffered']
    %7 = vsyncpa [#allocation4], 0
    %8 = vsyncpa [#allocation7], 0
    %9 = vsyncpa [#allocation5], 0
    // Predicated region
    $region2: #{tpu_custom_call.1} parent=1 // pred_check
      _
    $region3: #{tpu_custom_call.1} parent=1 // pred_check_branch
      %11 = sbr.rel (0) target = $region5
    $region4: #{tpu_custom_call.1} parent=1 // pred_region
      %s12 = sadd.s32 0, 0
      %s13 = smul.u32 2, %s12
      %15 = vsyncadd [#allocation4], 0
      %s16 = smul.addr %s13, 8
      %s17 = scalar_lea.hbm %s0, %s16
      %s18 = sshll.u32 %s17, 4
      %s19 = int_to_ptr.hbm [resolvable:$true] %s18
      %s20 = sshll.u32 [#allocation3], 4
      %s21 = int_to_ptr.vmem [resolvable:$true] %s20
      %26 = dma.hbm_to_vmem [thread:$0]  %s19, 256, %s21, [#allocation4], 128, 128, 8
    $region5: #{tpu_custom_call.1} parent=1 // pred_fallthru
      _
    // Predicated region
    $region6: #{tpu_custom_call.1} parent=1 // pred_check
      _
    $region7: #{tpu_custom_call.1} parent=1 // pred_check_branch
      %28 = sbr.rel (0) target = $region9
    $region8: #{tpu_custom_call.1} parent=1 // pred_region
      %s29 = sadd.s32 0, 0
      %s30 = smul.u32 2, %s29
      %32 = vsyncadd [#allocation7], 0
      %s33 = smul.addr %s30, 8
      %s34 = scalar_lea.hbm %s1, %s33
      %s35 = sshll.u32 %s34, 4
      %s36 = int_to_ptr.hbm [resolvable:$true] %s35
      %s37 = sshll.u32 [#allocation6], 4
      %s38 = int_to_ptr.vmem [resolvable:$true] %s37
      %43 = dma.hbm_to_vmem [thread:$0]  %s36, 256, %s38, [#allocation7], 128, 128, 8
    $region9: #{tpu_custom_call.1} parent=1 // pred_fallthru
      _
    // Predicated region
    $region10: #{tpu_custom_call.1} parent=1 // pred_check
      _
    $region11: #{tpu_custom_call.1} parent=1 // pred_check_branch
      %45 = sbr.rel (0) target = $region13
    $region12: #{tpu_custom_call.1} parent=1 // pred_region
      %47 = dma.done [#allocation4], 256
    $region13: #{tpu_custom_call.1} parent=1 // pred_fallthru
      _
    // Predicated region
    $region14: #{tpu_custom_call.1} parent=1 // pred_check
      _
    $region15: #{tpu_custom_call.1} parent=1 // pred_check_branch
      %49 = sbr.rel (0) target = $region17
    $region16: #{tpu_custom_call.1} parent=1 // pred_region
      %51 = dma.done [#allocation7], 256
    $region17: #{tpu_custom_call.1} parent=1 // pred_fallthru
      _
    %s52 = sadd.s32 0, 0
    %s53 = smul.u32 2, %s52
    %s54 = sadd.s32 0, 0
    %s55 = smul.u32 2, %s54
    %p56 = scmp.eq.s32.totalorder 0, 0
    // Predicated region
    $region18: #{tpu_custom_call.1} parent=1 // pred_check
      %p57 = pneg %p56
    $region19: #{tpu_custom_call.1} parent=1 // pred_check_branch
      %59 = sbr.rel (%p57) target = $region21
    $region20: #{tpu_custom_call.1} parent=1 // pred_region
      %60 = vst [vmem:[#allocation2] sm:$0xff] 0.0
    $region21: #{tpu_custom_call.1} parent=1 // pred_fallthru
      _
    %v61 = vld [vmem:[#allocation3] sm:$0xff]
    %v62 = vld [vmem:[#allocation3 + $0x8] sm:$0xff]
    %v63 = vld [vmem:[#allocation6] sm:$0xff]
    %v64 = vld [vmem:[#allocation6 + $0x8] sm:$0xff]
    %vm65 = vcmask 261120
    %v66 = vsel %vm65, %v61, -inf
    %67 = vmax.xlane.f32.xlu0 %v66
    %v68 = vpop.xlane.xlu0 %67
    %v69 = vsel %vm65, %v62, -inf
    %70 = vmax.xlane.f32.xlu0 %v69
    %v71 = vpop.xlane.xlu0 %70
    %v72 = vsub.f32 %v61, %v68
    %v73 = vsub.f32 %v62, %v71
    %v74 = vmul.f32 %v72, 1.442695
    %v75 = vpow.pop %v74
    %v76 = vmul.f32 %v73, 1.442695
    %v77 = vpow.pop %v76
    %v78 = vsel %vm65, %v75, 0.0
    %79 = vadd.xlane.f32.xlu0 %v78
    %v80 = vpop.xlane.xlu0 %79
    %v81 = vsel %vm65, %v77, 0.0
    %82 = vadd.xlane.f32.xlu0 %v81
    %v83 = vpop.xlane.xlu0 %82
    %v84 = vlog2.pop %v80
    %v85 = vmul.f32 %v84, 0.6931472
    %v86 = vlog2.pop %v83
    %v87 = vmul.f32 %v86, 0.6931472
    %v88 = vadd.f32 %v85, %v68
    %v89 = vadd.f32 %v87, %v71
    %v90 = vsub.f32 %v88, %v61
    %v91 = vsub.f32 %v89, %v62
    %v92 = vmul.f32 %v63, %v90
    %v93 = vmul.f32 %v64, %v91
    %v94 = vsel %vm65, %v92, 0.0
    %95 = vadd.xlane.f32.xlu0 %v94
    %v96 = vpop.xlane.xlu0 %95
    %v97 = vsel %vm65, %v93, 0.0
    %98 = vadd.xlane.f32.xlu0 %v97
    %v99 = vpop.xlane.xlu0 %98
    %s100 = sadd.s32 0, 0
    %s101 = smul.u32 %s100, 16
    %v102 = vlaneseq
    %v103 = vshrl.u32 %v102, 7
    %v104 = vadd.s32 %v103, 8
    %v105 = vstv %s101
    %v106 = vadd.s32 %v103, %v105
    %v107 = vadd.s32 %v104, %v105
    %vm108 = vcmp.lt.s32.totalorder %v106, 16
    %vm109 = vcmp.lt.s32.totalorder %v107, 16
    %v110 = vsel %vm108, %v96, 0.0
    %v111 = vsel %vm109, %v99, 0.0
    %v112 = vld [vmem:[#allocation2] sm:$0xff]
    %vm113 = vcmask 7168
    %v114 = vsel %vm113, %v110, 0.0
    %v115 = vsel %vm113, %v111, 0.0
    %v116 = vadd.f32 %v114, %v115
    %117 = vadd.xlane.f32.xlu0 %v116
    %v118 = vpop.xlane.xlu0 %117
    %v119 = vrot.slane %v118, 4
    %v120 = vadd.f32 %v118, %v119
    %v121 = vrot.slane %v120, 2
    %v122 = vadd.f32 %v120, %v121
    %v123 = vrot.slane %v122, 1
    %v124 = vadd.f32 %v122, %v123
    %s125 = vtos %v124
    %v126 = vstv %s125
    %v127 = vadd.f32 %v112, %v126
    %128 = vst [vmem:[#allocation2] sm:$0xff] %v127
    // Predicated region
    $region22: #{tpu_custom_call.1} parent=1 // pred_check
      %p129 = pneg %p56
    $region23: #{tpu_custom_call.1} parent=1 // pred_check_branch
      %131 = sbr.rel (%p129) target = $region25
    $region24: #{tpu_custom_call.1} parent=1 // pred_region
      %v132 = vlaneseq
      %v133 = vand.u32 %v132, 127
      %vm134 = vcmp.eq.s32.totalorder %v103, 0
      %vm135 = vcmp.eq.s32.totalorder %v133, 0
      %vm136 = vmand %vm134, %vm135
      %v137 = vld [vmem:[#allocation2] sm:$0xff]
      %v138 = vsel %vm136, %v137, 0.0
      %139 = vst [vmem:[#allocation8] sm:$0xff] %v138
    $region25: #{tpu_custom_call.1} parent=1 // pred_fallthru
      _
    // Predicated region
    $region26: #{tpu_custom_call.1} parent=1 // pred_check
      _
    $region27: #{tpu_custom_call.1} parent=1 // pred_check_branch
      %141 = sbr.rel (0) target = $region29
    $region28: #{tpu_custom_call.1} parent=1 // pred_region
      %143 = vsyncadd [#allocation5], 0
      %s145 = sshll.u32 [#allocation8], 4
      %s146 = int_to_ptr.vmem [resolvable:$true] %s145
      %s147 = sshll.u32 %s2, 4
      %s148 = int_to_ptr.hbm [resolvable:$true] %s147
      %150 = dma.vmem_to_hbm [thread:$0]  %s146, 128, %s148, [#allocation5]
    $region29: #{tpu_custom_call.1} parent=1 // pred_fallthru
      _
    // Predicated region
    $region30: #{tpu_custom_call.1} parent=1 // pred_check
      _
    $region31: #{tpu_custom_call.1} parent=1 // pred_check_branch
      %152 = sbr.rel (0) target = $region33
    $region32: #{tpu_custom_call.1} parent=1 // pred_region
      %154 = dma.done [#allocation5], 128
    $region33: #{tpu_custom_call.1} parent=1 // pred_fallthru
      _
    %155 = vsyncpa [#allocation4], 1
    %156 = vsyncpa [#allocation7], 1
    %157 = vsyncpa [#allocation5], 1

</llo_original>
